<compile_context>
chip_gen: v7x
topology: tpu7x:2x2x1
jax: 0.10.0
libtpu: 0.0.40
codegen_flags: <defaults>
</compile_context>

<pallas_src>
import jax
import jax.numpy as jnp
from jax.experimental import pallas as pl
from jax.experimental.pallas import tpu as pltpu


# ---------------------------------------------------------------------------
# Fused Pallas kernel: pool + projections + sentence maxpool + 3x FGU
# ---------------------------------------------------------------------------

def _net_fused_kernel(nframes_ref, audio_ref, video_ref, text_ref,
                      vproj_wt_ref, vproj_b_ref, aproj_wt_ref, aproj_b_ref,
                      tpool_wt_ref, tpool_b_ref,
                      fgu_wt_ref, fgu_b_ref,
                      cg_wt_ref, cg_b_ref,
                      out_ref):
    bb, T, C = audio_ref.shape            # audio tile is (bb, T, C): C=1024 lane-dense, T on sublanes
    _, L, Dw = text_ref.shape
    half = vproj_wt_ref.shape[1]

    # ---- eval-mode adaptive avg-pool over the first clamp(nframes, 1, T) frames ----
    # Mask + sum only; the 1/nf scale is applied AFTER the (C -> half) projection (projection is
    # linear), so the divide/scale touches a (bb, half) tensor instead of (bb, T, C).
    nf = jnp.clip(nframes_ref[...], 1, T)                                    # (bb, 1, 1) int32
    t_idx = jax.lax.broadcasted_iota(jnp.int32, (bb, T, C), 1)
    summed = jnp.sum(jnp.where(t_idx < nf, audio_ref[...], 0.0), axis=1)     # (bb, C) sublane reduce
    inv_nf = 1.0 / nf.reshape(bb, 1).astype(jnp.float32)                     # (bb, 1), exact

    # ---- linear projections (video / DAVEnet) ----
    video_p = jnp.dot(video_ref[...], vproj_wt_ref[...],
                      preferred_element_type=jnp.float32) + vproj_b_ref[...]             # (bb, half)
    audio_p = (jnp.dot(summed, aproj_wt_ref[...],
                       preferred_element_type=jnp.float32) * inv_nf) + aproj_b_ref[...]  # (bb, half)

    # ---- Sentence_Maxpool: one 2-D matmul over (bb*L, Dw); relu AFTER max (monotone => identical) ----
    y = (jnp.dot(text_ref[...].reshape(bb * L, Dw), tpool_wt_ref[...],
                 preferred_element_type=jnp.float32) + tpool_b_ref[...]).reshape(bb, L, half)
    text_p = jnp.maximum(jnp.max(y, axis=1), 0.0)                            # (bb, half)

    # ---- Fused_Gated_Unit + Context_Gating: K-fused weight, one (3*bb, 2*half) register stack ----
    s = jnp.concatenate([jnp.concatenate([audio_p, text_p], axis=1),    # (audio, text)
                         jnp.concatenate([audio_p, video_p], axis=1),   # (audio, video)
                         jnp.concatenate([text_p, video_p], axis=1)],   # (text,  video)
                        axis=0)                                          # (3*bb, 2*half)
    h = jnp.dot(s, fgu_wt_ref[...], preferred_element_type=jnp.float32) + fgu_b_ref[...]
    g = jnp.dot(h, cg_wt_ref[...], preferred_element_type=jnp.float32) + cg_b_ref[...]
    fused = h * jax.nn.sigmoid(g)                                        # (3*bb, embd)
    out_ref[0] = fused[0:bb]              # audio_text
    out_ref[1] = fused[bb:2 * bb]         # audio_video
    out_ref[2] = fused[2 * bb:3 * bb]     # text_video


# ---------------------------------------------------------------------------
# Wrappers
# ---------------------------------------------------------------------------

# 128 rows * T * 1024 ch * 4 B = 4 MiB per audio buffer at T=8 -> double-buffered tiles fit the
# default scoped VMEM limit on v5e (16 MiB) and leave headroom on v6e/v7x.
_MAX_B_TILE = 128


def prepare_params(params):
    """One-time layout plumbing: matmul weights lane-dense (Din, Dout), biases (1, Dout),
    and the two FGU linears K-fused into a single (2*half, embd) weight + summed bias."""
    def t(w): return jnp.asarray(w).T
    def r(b): return jnp.asarray(b).reshape(1, -1)
    return {
        "video_proj_wt": t(params["video_proj_w"]), "video_proj_b": r(params["video_proj_b"]),
        "audio_proj_wt": t(params["audio_proj_w"]), "audio_proj_b": r(params["audio_proj_b"]),
        "text_pool_wt": t(params["text_pool_w"]), "text_pool_b": r(params["text_pool_b"]),
        "fgu_wt": jnp.concatenate([t(params["fc_audio_w"]), t(params["fc_text_w"])], axis=0),
        "fgu_b": r(params["fc_audio_b"] + params["fc_text_b"]),
        "cg_wt": t(params["cg_w"]), "cg_b": r(params["cg_b"]),
    }


@jax.jit
def net_forward(prepped, video, audio_feats, nframes, text):
    B, C, T = audio_feats.shape
    _, video_dim = video.shape
    _, L, we_dim = text.shape
    half = prepped["video_proj_wt"].shape[1]
    embd = prepped["fgu_wt"].shape[1]

    # Layout plumbing only (free/tiny in XLA): channels on lanes, nframes as a (B,1,1) int block.
    audio_t = jnp.swapaxes(audio_feats, 1, 2)                  # (B, T, C)
    nframes3 = nframes.astype(jnp.int32).reshape(B, 1, 1)
    # TODO(synk): at large B the kernel is HBM-bound on audio_t; cast audio_t + audio_proj_wt to
    #             bf16 (keep preferred_element_type=f32) to halve DMA bytes and VMEM footprint.

    # Batch grid: one tile when B is small, fixed-size tiles (zero-padded remainder) otherwise.
    block_b = B if B <= _MAX_B_TILE else _MAX_B_TILE
    pad = (-B) % block_b
    if pad:
        audio_t = jnp.pad(audio_t, ((0, pad), (0, 0), (0, 0)))
        video = jnp.pad(video, ((0, pad), (0, 0)))
        text = jnp.pad(text, ((0, pad), (0, 0), (0, 0)))
        nframes3 = jnp.pad(nframes3, ((0, pad), (0, 0), (0, 0)))
    Bp = B + pad

    # Advisory cost hint for XLA's scheduler.
    flops = int(2 * Bp * T * C
                + 2 * Bp * (video_dim * half + C * half + L * we_dim * half
                            + 3 * 2 * half * embd + 3 * embd * embd))
    param_bytes = sum(int(v.size) * 4 for v in prepped.values())
    bytes_accessed = int(4 * (Bp * T * C + Bp * video_dim + Bp * L * we_dim + Bp + 3 * Bp * embd)
                         + param_bytes)

    bmap3 = lambda b: (b, 0, 0)      # batch-tiled 3-D operands
    bmap2 = lambda b: (b, 0)         # batch-tiled 2-D operands
    wmap = lambda b: (0, 0)          # weights/biases: constant block -> stay VMEM-resident across grid

    out = pl.pallas_call(
        _net_fused_kernel,
        out_shape=jax.ShapeDtypeStruct((3, Bp, embd), jnp.float32),
        grid=(Bp // block_b,),
        in_specs=[
            pl.BlockSpec((block_b, 1, 1), bmap3),          # nframes
            pl.BlockSpec((block_b, T, C), bmap3),          # audio (B,T,C)
            pl.BlockSpec((block_b, video_dim), bmap2),     # video
            pl.BlockSpec((block_b, L, we_dim), bmap3),     # text
            pl.BlockSpec((video_dim, half), wmap), pl.BlockSpec((1, half), wmap),
            pl.BlockSpec((C, half), wmap), pl.BlockSpec((1, half), wmap),
            pl.BlockSpec((we_dim, half), wmap), pl.BlockSpec((1, half), wmap),
            pl.BlockSpec((2 * half, embd), wmap), pl.BlockSpec((1, embd), wmap),
            pl.BlockSpec((embd, embd), wmap), pl.BlockSpec((1, embd), wmap),
        ],
        out_specs=pl.BlockSpec((3, block_b, embd), lambda b: (0, b, 0)),
        compiler_params=pltpu.CompilerParams(dimension_semantics=("parallel",)),
        cost_estimate=pl.CostEstimate(flops=flops, transcendentals=int(3 * Bp * embd),
                                      bytes_accessed=bytes_accessed),
    )(nframes3, audio_t, video, text,
      prepped["video_proj_wt"], prepped["video_proj_b"],
      prepped["audio_proj_wt"], prepped["audio_proj_b"],
      prepped["text_pool_wt"], prepped["text_pool_b"],
      prepped["fgu_wt"], prepped["fgu_b"],
      prepped["cg_wt"], prepped["cg_b"])

    return out[0, :B], out[1, :B], out[2, :B]   # (audio_text, audio_video, text_video)


# ---------------------------------------------------------------------------
# Pure-JAX reference (mirrors the PyTorch forward) for correctness checking
# ---------------------------------------------------------------------------

def _reference(params, video, audio_feats, nframes, text):
    B, C, T = audio_feats.shape
    nf = jnp.clip(nframes, 1, T)
    mask = (jnp.arange(T)[None, None, :] < nf[:, None, None]).astype(jnp.float32)
    pooled = (audio_feats * mask).sum(axis=2) / nf[:, None].astype(jnp.float32)

    def lin(x, w, b): return x @ w.T + b
    video_p = lin(video, params["video_proj_w"], params["video_proj_b"])
    audio_p = lin(pooled, params["audio_proj_w"], params["audio_proj_b"])
    y = jnp.maximum(jnp.einsum('bld,hd->blh', text, params["text_pool_w"]) + params["text_pool_b"], 0.0)
    text_p = y.max(axis=1)

    def fgu(a, t):
        h = lin(a, params["fc_audio_w"], params["fc_audio_b"]) + lin(t, params["fc_text_w"], params["fc_text_b"])
        g = lin(h, params["cg_w"], params["cg_b"])
        return h * jax.nn.sigmoid(g)

    return fgu(audio_p, text_p), fgu(audio_p, video_p), fgu(text_p, video_p)


# ---------------------------------------------------------------------------
# Deterministic parameter init (PyTorch nn.Linear default: U(-1/sqrt(fan_in), +))
# ---------------------------------------------------------------------------

def init_linear(key, din, dout):
    kw, kb = jax.random.split(key)
    bound = 1.0 / float(din) ** 0.5
    w = jax.random.uniform(kw, (dout, din), jnp.float32, -bound, bound)
    b = jax.random.uniform(kb, (dout,), jnp.float32, -bound, bound)
    return w, b


if __name__ == "__main__":
    key = jax.random.PRNGKey(0)

    # small shapes consistent with the module's forward
    B = 2
    embd_dim = 32                 # Net(embd_dim=...)
    half = embd_dim // 2
    video_dim = 48
    we_dim = 24
    audio_feat_dim = 1024         # DAVEnet output channels (fixed in the module)
    T = 8                         # pooled audio frames
    L = 8                         # words per caption

    ks = jax.random.split(key, 16)
    params = {}
    params["video_proj_w"], params["video_proj_b"] = init_linear(ks[0], video_dim, half)
    params["audio_proj_w"], params["audio_proj_b"] = init_linear(ks[1], audio_feat_dim, half)
    params["text_pool_w"], params["text_pool_b"] = init_linear(ks[2], we_dim, half)
    params["fc_audio_w"], params["fc_audio_b"] = init_linear(ks[3], half, embd_dim)
    params["fc_text_w"], params["fc_text_b"] = init_linear(ks[4], half, embd_dim)
    params["cg_w"], params["cg_b"] = init_linear(ks[5], embd_dim, embd_dim)

    video = jax.random.normal(ks[6], (B, video_dim), jnp.float32)
    audio_feats = jax.random.normal(ks[7], (B, audio_feat_dim, T), jnp.float32)
    text = jax.random.normal(ks[8], (B, L, we_dim), jnp.float32)
    nframes = jnp.array([5, 8], dtype=jnp.int32)   # already in pooled-frame units

    prepped = prepare_params(params)
    outs = net_forward(prepped, video, audio_feats, nframes, text)
    outs = jax.block_until_ready(outs)

    refs = _reference(params, video, audio_feats, nframes, text)

    assert all(o.shape == (B, embd_dim) for o in outs)
    assert all(o.dtype == jnp.float32 for o in outs)
    assert all(bool(jnp.all(jnp.isfinite(o))) for o in outs)
    assert all(bool(jnp.allclose(o, r, atol=2e-2, rtol=2e-2)) for o, r in zip(outs, refs))

    print("KERNEL_OK")
</pallas_src>

<mosaic_0001>
module attributes {stable_mosaic.version = 11 : i64} {
  func.func @_net_fused_kernel(%arg0: i32, %arg1: memref<2x1x1xi32, #tpu.memory_space<vmem>>, %arg2: memref<2x8x1024xf32, #tpu.memory_space<vmem>>, %arg3: memref<2x48xf32, #tpu.memory_space<vmem>>, %arg4: memref<2x8x24xf32, #tpu.memory_space<vmem>>, %arg5: memref<48x16xf32, #tpu.memory_space<vmem>>, %arg6: memref<1x16xf32, #tpu.memory_space<vmem>>, %arg7: memref<1024x16xf32, #tpu.memory_space<vmem>>, %arg8: memref<1x16xf32, #tpu.memory_space<vmem>>, %arg9: memref<24x16xf32, #tpu.memory_space<vmem>>, %arg10: memref<1x16xf32, #tpu.memory_space<vmem>>, %arg11: memref<32x32xf32, #tpu.memory_space<vmem>>, %arg12: memref<1x32xf32, #tpu.memory_space<vmem>>, %arg13: memref<32x32xf32, #tpu.memory_space<vmem>>, %arg14: memref<1x32xf32, #tpu.memory_space<vmem>>, %arg15: memref<3x2x32xf32, #tpu.memory_space<vmem>>) attributes {dimension_semantics = [#tpu.dimension_semantics<parallel>], iteration_bounds = array<i64: 1>, scalar_prefetch = 0 : i64, scratch_operands = 0 : i64, tpu.core_type = #tpu.core_type<tc>, window_params = [{transform_indices = @transform_0, window_bounds = array<i64: 2, 1, 1>}, {transform_indices = @transform_1, window_bounds = array<i64: 2, 8, 1024>}, {transform_indices = @transform_2, window_bounds = array<i64: 2, 48>}, {transform_indices = @transform_3, window_bounds = array<i64: 2, 8, 24>}, {pipeline_mode = #tpu.pipeline_mode<synchronous>, transform_indices = @transform_4, window_bounds = array<i64: 48, 16>}, {pipeline_mode = #tpu.pipeline_mode<synchronous>, transform_indices = @transform_5, window_bounds = array<i64: 1, 16>}, {pipeline_mode = #tpu.pipeline_mode<synchronous>, transform_indices = @transform_6, window_bounds = array<i64: 1024, 16>}, {pipeline_mode = #tpu.pipeline_mode<synchronous>, transform_indices = @transform_7, window_bounds = array<i64: 1, 16>}, {pipeline_mode = #tpu.pipeline_mode<synchronous>, transform_indices = @transform_8, window_bounds = array<i64: 24, 16>}, {pipeline_mode = #tpu.pipeline_mode<synchronous>, transform_indices = @transform_9, window_bounds = array<i64: 1, 16>}, {pipeline_mode = #tpu.pipeline_mode<synchronous>, transform_indices = @transform_10, window_bounds = array<i64: 32, 32>}, {pipeline_mode = #tpu.pipeline_mode<synchronous>, transform_indices = @transform_11, window_bounds = array<i64: 1, 32>}, {pipeline_mode = #tpu.pipeline_mode<synchronous>, transform_indices = @transform_12, window_bounds = array<i64: 32, 32>}, {pipeline_mode = #tpu.pipeline_mode<synchronous>, transform_indices = @transform_13, window_bounds = array<i64: 1, 32>}, {transform_indices = @transform_14, window_bounds = array<i64: 3, 2, 32>}]} {
    %c0 = arith.constant 0 : index
    %c0_0 = arith.constant 0 : index
    %c0_1 = arith.constant 0 : index
    %0 = vector.load %arg1[%c0, %c0_0, %c0_1] : memref<2x1x1xi32, #tpu.memory_space<vmem>>, vector<2x1x1xi32>
    %c1_i32 = arith.constant 1 : i32
    %c8_i32 = arith.constant 8 : i32
    %1 = vector.broadcast %c1_i32 : i32 to vector<2x1x1xi32>
    %2 = arith.maxsi %1, %0 : vector<2x1x1xi32>
    %3 = vector.broadcast %c8_i32 : i32 to vector<2x1x1xi32>
    %4 = arith.minsi %3, %2 : vector<2x1x1xi32>
    %5 = tpu.iota {dimensions = array<i32: 1>} : vector<2x8x1024xi32>
    %6 = vector.broadcast %4 : vector<2x1x1xi32> to vector<2x8x1024xi32>
    %7 = arith.cmpi slt, %5, %6 : vector<2x8x1024xi32>
    %c0_2 = arith.constant 0 : index
    %c0_3 = arith.constant 0 : index
    %c0_4 = arith.constant 0 : index
    %8 = vector.load %arg2[%c0_2, %c0_3, %c0_4] : memref<2x8x1024xf32, #tpu.memory_space<vmem>>, vector<2x8x1024xf32>
    %cst = arith.constant 0.000000e+00 : f32
    %9 = vector.broadcast %cst : f32 to vector<2x8x1024xf32>
    %10 = arith.select %7, %8, %9 : vector<2x8x1024xi1>, vector<2x8x1024xf32>
    %cst_5 = arith.constant dense<0.000000e+00> : vector<2x1024xf32>
    %11 = vector.multi_reduction <add>, %10, %cst_5 [1] : vector<2x8x1024xf32> to vector<2x1024xf32>
    %12 = vector.shape_cast %4 : vector<2x1x1xi32> to vector<2x1xi32>
    %13 = arith.sitofp %12 : vector<2x1xi32> to vector<2x1xf32>
    %cst_6 = arith.constant 1.000000e+00 : f32
    %14 = vector.broadcast %cst_6 : f32 to vector<2x1xf32>
    %15 = arith.divf %14, %13 : vector<2x1xf32>
    %c0_7 = arith.constant 0 : index
    %c0_8 = arith.constant 0 : index
    %16 = vector.load %arg3[%c0_7, %c0_8] : memref<2x48xf32, #tpu.memory_space<vmem>>, vector<2x48xf32>
    %c0_9 = arith.constant 0 : index
    %c0_10 = arith.constant 0 : index
    %17 = vector.load %arg5[%c0_9, %c0_10] : memref<48x16xf32, #tpu.memory_space<vmem>>, vector<48x16xf32>
    %cst_11 = arith.constant dense<0.000000e+00> : vector<2x16xf32>
    %18 = tpu.matmul %16, %17, %cst_11 {dimension_numbers = #tpu.dot_dimension_numbers<[1], [0], [0], [1], [0, 0, 1, 1], [], []>} : vector<2x48xf32>, vector<48x16xf32>, vector<2x16xf32> -> vector<2x16xf32>
    %c0_12 = arith.constant 0 : index
    %c0_13 = arith.constant 0 : index
    %19 = vector.load %arg6[%c0_12, %c0_13] : memref<1x16xf32, #tpu.memory_space<vmem>>, vector<1x16xf32>
    %20 = vector.broadcast %19 : vector<1x16xf32> to vector<2x16xf32>
    %21 = arith.addf %18, %20 : vector<2x16xf32>
    %c0_14 = arith.constant 0 : index
    %c0_15 = arith.constant 0 : index
    %22 = vector.load %arg7[%c0_14, %c0_15] : memref<1024x16xf32, #tpu.memory_space<vmem>>, vector<1024x16xf32>
    %cst_16 = arith.constant dense<0.000000e+00> : vector<2x16xf32>
    %23 = tpu.matmul %11, %22, %cst_16 {dimension_numbers = #tpu.dot_dimension_numbers<[1], [0], [0], [1], [0, 0, 1, 1], [], []>} : vector<2x1024xf32>, vector<1024x16xf32>, vector<2x16xf32> -> vector<2x16xf32>
    %24 = vector.broadcast %15 : vector<2x1xf32> to vector<2x16xf32>
    %25 = arith.mulf %23, %24 : vector<2x16xf32>
    %c0_17 = arith.constant 0 : index
    %c0_18 = arith.constant 0 : index
    %26 = vector.load %arg8[%c0_17, %c0_18] : memref<1x16xf32, #tpu.memory_space<vmem>>, vector<1x16xf32>
    %27 = vector.broadcast %26 : vector<1x16xf32> to vector<2x16xf32>
    %28 = arith.addf %25, %27 : vector<2x16xf32>
    %c0_19 = arith.constant 0 : index
    %c0_20 = arith.constant 0 : index
    %c0_21 = arith.constant 0 : index
    %29 = vector.load %arg4[%c0_19, %c0_20, %c0_21] : memref<2x8x24xf32, #tpu.memory_space<vmem>>, vector<2x8x24xf32>
    %30 = vector.shape_cast %29 : vector<2x8x24xf32> to vector<16x24xf32>
    %c0_22 = arith.constant 0 : index
    %c0_23 = arith.constant 0 : index
    %31 = vector.load %arg9[%c0_22, %c0_23] : memref<24x16xf32, #tpu.memory_space<vmem>>, vector<24x16xf32>
    %cst_24 = arith.constant dense<0.000000e+00> : vector<16x16xf32>
    %32 = tpu.matmul %30, %31, %cst_24 {dimension_numbers = #tpu.dot_dimension_numbers<[1], [0], [0], [1], [0, 0, 1, 1], [], []>} : vector<16x24xf32>, vector<24x16xf32>, vector<16x16xf32> -> vector<16x16xf32>
    %c0_25 = arith.constant 0 : index
    %c0_26 = arith.constant 0 : index
    %33 = vector.load %arg10[%c0_25, %c0_26] : memref<1x16xf32, #tpu.memory_space<vmem>>, vector<1x16xf32>
    %34 = vector.broadcast %33 : vector<1x16xf32> to vector<16x16xf32>
    %35 = arith.addf %32, %34 : vector<16x16xf32>
    %36 = vector.shape_cast %35 : vector<16x16xf32> to vector<2x8x16xf32>
    %cst_27 = arith.constant dense<0xFF800000> : vector<2x16xf32>
    %37 = vector.multi_reduction <maximumf>, %36, %cst_27 [1] : vector<2x8x16xf32> to vector<2x16xf32>
    %cst_28 = arith.constant 0.000000e+00 : f32
    %38 = vector.broadcast %cst_28 : f32 to vector<2x16xf32>
    %39 = arith.maximumf %37, %38 : vector<2x16xf32>
    %40 = tpu.concatenate %28, %39 in 1 : vector<2x16xf32>, vector<2x16xf32> -> vector<2x32xf32>
    %41 = tpu.concatenate %28, %21 in 1 : vector<2x16xf32>, vector<2x16xf32> -> vector<2x32xf32>
    %42 = tpu.concatenate %39, %21 in 1 : vector<2x16xf32>, vector<2x16xf32> -> vector<2x32xf32>
    %43 = tpu.concatenate %40, %41, %42 in 0 : vector<2x32xf32>, vector<2x32xf32>, vector<2x32xf32> -> vector<6x32xf32>
    %c0_29 = arith.constant 0 : index
    %c0_30 = arith.constant 0 : index
    %44 = vector.load %arg11[%c0_29, %c0_30] : memref<32x32xf32, #tpu.memory_space<vmem>>, vector<32x32xf32>
    %cst_31 = arith.constant dense<0.000000e+00> : vector<6x32xf32>
    %45 = tpu.matmul %43, %44, %cst_31 {dimension_numbers = #tpu.dot_dimension_numbers<[1], [0], [0], [1], [0, 0, 1, 1], [], []>} : vector<6x32xf32>, vector<32x32xf32>, vector<6x32xf32> -> vector<6x32xf32>
    %c0_32 = arith.constant 0 : index
    %c0_33 = arith.constant 0 : index
    %46 = vector.load %arg12[%c0_32, %c0_33] : memref<1x32xf32, #tpu.memory_space<vmem>>, vector<1x32xf32>
    %47 = vector.broadcast %46 : vector<1x32xf32> to vector<6x32xf32>
    %48 = arith.addf %45, %47 : vector<6x32xf32>
    %c0_34 = arith.constant 0 : index
    %c0_35 = arith.constant 0 : index
    %49 = vector.load %arg13[%c0_34, %c0_35] : memref<32x32xf32, #tpu.memory_space<vmem>>, vector<32x32xf32>
    %cst_36 = arith.constant dense<0.000000e+00> : vector<6x32xf32>
    %50 = tpu.matmul %48, %49, %cst_36 {dimension_numbers = #tpu.dot_dimension_numbers<[1], [0], [0], [1], [0, 0, 1, 1], [], []>} : vector<6x32xf32>, vector<32x32xf32>, vector<6x32xf32> -> vector<6x32xf32>
    %c0_37 = arith.constant 0 : index
    %c0_38 = arith.constant 0 : index
    %51 = vector.load %arg14[%c0_37, %c0_38] : memref<1x32xf32, #tpu.memory_space<vmem>>, vector<1x32xf32>
    %52 = vector.broadcast %51 : vector<1x32xf32> to vector<6x32xf32>
    %53 = arith.addf %50, %52 : vector<6x32xf32>
    %54 = arith.negf %53 : vector<6x32xf32>
    %55 = math.exp %54 : vector<6x32xf32>
    %cst_39 = arith.constant 1.000000e+00 : f32
    %56 = vector.broadcast %cst_39 : f32 to vector<6x32xf32>
    %57 = arith.addf %56, %55 : vector<6x32xf32>
    %58 = arith.divf %56, %57 : vector<6x32xf32>
    %59 = arith.mulf %48, %58 : vector<6x32xf32>
    %60 = vector.extract_strided_slice %59 {offsets = [0, 0], sizes = [2, 32], strides = [1, 1]} : vector<6x32xf32> to vector<2x32xf32>
    %c0_40 = arith.constant 0 : index
    %c0_41 = arith.constant 0 : index
    %c0_42 = arith.constant 0 : index
    %61 = vector.load %arg15[%c0_40, %c0_41, %c0_42] : memref<3x2x32xf32, #tpu.memory_space<vmem>>, vector<1x2x32xf32>
    %62 = vector.shape_cast %61 : vector<1x2x32xf32> to vector<2x32xf32>
    %63 = vector.shape_cast %60 : vector<2x32xf32> to vector<1x2x32xf32>
    tpu.vector_store %arg15[%c0_40, %c0_41, %c0_42], %63 {strides = array<i32>} : memref<3x2x32xf32, #tpu.memory_space<vmem>>, vector<1x2x32xf32>,
    %64 = vector.extract_strided_slice %59 {offsets = [2, 0], sizes = [2, 32], strides = [1, 1]} : vector<6x32xf32> to vector<2x32xf32>
    %c1 = arith.constant 1 : index
    %c0_43 = arith.constant 0 : index
    %c0_44 = arith.constant 0 : index
    %65 = vector.load %arg15[%c1, %c0_43, %c0_44] : memref<3x2x32xf32, #tpu.memory_space<vmem>>, vector<1x2x32xf32>
    %66 = vector.shape_cast %65 : vector<1x2x32xf32> to vector<2x32xf32>
    %67 = vector.shape_cast %64 : vector<2x32xf32> to vector<1x2x32xf32>
    tpu.vector_store %arg15[%c1, %c0_43, %c0_44], %67 {strides = array<i32>} : memref<3x2x32xf32, #tpu.memory_space<vmem>>, vector<1x2x32xf32>,
    %68 = vector.extract_strided_slice %59 {offsets = [4, 0], sizes = [2, 32], strides = [1, 1]} : vector<6x32xf32> to vector<2x32xf32>
    %c2 = arith.constant 2 : index
    %c0_45 = arith.constant 0 : index
    %c0_46 = arith.constant 0 : index
    %69 = vector.load %arg15[%c2, %c0_45, %c0_46] : memref<3x2x32xf32, #tpu.memory_space<vmem>>, vector<1x2x32xf32>
    %70 = vector.shape_cast %69 : vector<1x2x32xf32> to vector<2x32xf32>
    %71 = vector.shape_cast %68 : vector<2x32xf32> to vector<1x2x32xf32>
    tpu.vector_store %arg15[%c2, %c0_45, %c0_46], %71 {strides = array<i32>} : memref<3x2x32xf32, #tpu.memory_space<vmem>>, vector<1x2x32xf32>,
    return
  }
  func.func @transform_0(%arg0: i32) -> (i32, i32, i32) {
    %c0_i32 = arith.constant 0 : i32
    %c0_i32_0 = arith.constant 0 : i32
    %c0_i32_1 = arith.constant 0 : i32
    return %arg0, %c0_i32, %c0_i32_0 : i32, i32, i32
  }
  func.func @transform_1(%arg0: i32) -> (i32, i32, i32) {
    %c0_i32 = arith.constant 0 : i32
    %c0_i32_0 = arith.constant 0 : i32
    %c0_i32_1 = arith.constant 0 : i32
    return %arg0, %c0_i32, %c0_i32_0 : i32, i32, i32
  }
  func.func @transform_2(%arg0: i32) -> (i32, i32) {
    %c0_i32 = arith.constant 0 : i32
    %c0_i32_0 = arith.constant 0 : i32
    return %arg0, %c0_i32 : i32, i32
  }
  func.func @transform_3(%arg0: i32) -> (i32, i32, i32) {
    %c0_i32 = arith.constant 0 : i32
    %c0_i32_0 = arith.constant 0 : i32
    %c0_i32_1 = arith.constant 0 : i32
    return %arg0, %c0_i32, %c0_i32_0 : i32, i32, i32
  }
  func.func @transform_4(%arg0: i32) -> (i32, i32) {
    %c0_i32 = arith.constant 0 : i32
    %c0_i32_0 = arith.constant 0 : i32
    %c0_i32_1 = arith.constant 0 : i32
    return %c0_i32, %c0_i32_0 : i32, i32
  }
  func.func @transform_5(%arg0: i32) -> (i32, i32) {
    %c0_i32 = arith.constant 0 : i32
    %c0_i32_0 = arith.constant 0 : i32
    %c0_i32_1 = arith.constant 0 : i32
    return %c0_i32, %c0_i32_0 : i32, i32
  }
  func.func @transform_6(%arg0: i32) -> (i32, i32) {
    %c0_i32 = arith.constant 0 : i32
    %c0_i32_0 = arith.constant 0 : i32
    %c0_i32_1 = arith.constant 0 : i32
    return %c0_i32, %c0_i32_0 : i32, i32
  }
  func.func @transform_7(%arg0: i32) -> (i32, i32) {
    %c0_i32 = arith.constant 0 : i32
    %c0_i32_0 = arith.constant 0 : i32
    %c0_i32_1 = arith.constant 0 : i32
    return %c0_i32, %c0_i32_0 : i32, i32
  }
  func.func @transform_8(%arg0: i32) -> (i32, i32) {
    %c0_i32 = arith.constant 0 : i32
    %c0_i32_0 = arith.constant 0 : i32
    %c0_i32_1 = arith.constant 0 : i32
    return %c0_i32, %c0_i32_0 : i32, i32
  }
  func.func @transform_9(%arg0: i32) -> (i32, i32) {
    %c0_i32 = arith.constant 0 : i32
    %c0_i32_0 = arith.constant 0 : i32
    %c0_i32_1 = arith.constant 0 : i32
    return %c0_i32, %c0_i32_0 : i32, i32
  }
  func.func @transform_10(%arg0: i32) -> (i32, i32) {
    %c0_i32 = arith.constant 0 : i32
    %c0_i32_0 = arith.constant 0 : i32
    %c0_i32_1 = arith.constant 0 : i32
    return %c0_i32, %c0_i32_0 : i32, i32
  }
  func.func @transform_11(%arg0: i32) -> (i32, i32) {
    %c0_i32 = arith.constant 0 : i32
    %c0_i32_0 = arith.constant 0 : i32
    %c0_i32_1 = arith.constant 0 : i32
    return %c0_i32, %c0_i32_0 : i32, i32
  }
  func.func @transform_12(%arg0: i32) -> (i32, i32) {
    %c0_i32 = arith.constant 0 : i32
    %c0_i32_0 = arith.constant 0 : i32
    %c0_i32_1 = arith.constant 0 : i32
    return %c0_i32, %c0_i32_0 : i32, i32
  }
  func.func @transform_13(%arg0: i32) -> (i32, i32) {
    %c0_i32 = arith.constant 0 : i32
    %c0_i32_0 = arith.constant 0 : i32
    %c0_i32_1 = arith.constant 0 : i32
    return %c0_i32, %c0_i32_0 : i32, i32
  }
  func.func @transform_14(%arg0: i32) -> (i32, i32, i32) {
    %c0_i32 = arith.constant 0 : i32
    %c0_i32_0 = arith.constant 0 : i32
    %c0_i32_1 = arith.constant 0 : i32
    return %c0_i32, %arg0, %c0_i32_0 : i32, i32, i32
  }
}

</mosaic_0001>

<llo_original>
// kernel: net_forward.1
$region0: #{net_forward.1}
  #allocation0 [shape = 'u32[]', space=smem, size = 0x4, offset = 0x4, fixed_abs, tag = 'smem constant byte address 0x4 - core index']
  #allocation1 [shape = 'u32[144,128]{1,0:T(1,128)}', space=vmem, size = 0x12000, scoped, tag = 'internal scratch']
  %s0 = inlined_call_operand.vmem [shape: s32[2,1,1], index: 0, kind: input, shape index: {}]
  %s1 = inlined_call_operand.vmem [shape: f32[2,8,1024], index: 1, kind: input, shape index: {}]
  %s2 = inlined_call_operand.vmem [shape: f32[2,48], index: 2, kind: input, shape index: {}]
  %s3 = inlined_call_operand.vmem [shape: f32[2,8,24], index: 3, kind: input, shape index: {}]
  %s4 = inlined_call_operand.vmem [shape: f32[48,16], index: 4, kind: input, shape index: {}]
  %s5 = inlined_call_operand.vmem [shape: f32[1,16], index: 5, kind: input, shape index: {}]
  %s6 = inlined_call_operand.vmem [shape: f32[1024,16], index: 6, kind: input, shape index: {}]
  %s7 = inlined_call_operand.vmem [shape: f32[1,16], index: 7, kind: input, shape index: {}]
  %s8 = inlined_call_operand.vmem [shape: f32[24,16], index: 8, kind: input, shape index: {}]
  %s9 = inlined_call_operand.vmem [shape: f32[1,16], index: 9, kind: input, shape index: {}]
  %s10 = inlined_call_operand.vmem [shape: f32[32,32], index: 10, kind: input, shape index: {}]
  %s11 = inlined_call_operand.vmem [shape: f32[1,32], index: 11, kind: input, shape index: {}]
  %s12 = inlined_call_operand.vmem [shape: f32[32,32], index: 12, kind: input, shape index: {}]
  %s13 = inlined_call_operand.vmem [shape: f32[1,32], index: 13, kind: input, shape index: {}]
  %s14 = inlined_call_operand.vmem [shape: f32[3,2,32], index: 14, kind: output, shape index: {}]
  %s15 = sld [smem:[#allocation0]]
  $region66: #{net_forward.1} parent=0
    _
  %s17 = ssub.s32 1, %s15
  %s18 = scalar_select 0, %s17, %s15
  // Predicated region
  $region2: #{net_forward.1} parent=0 // pred_check
    _
  $region3: #{net_forward.1} parent=0 // pred_check_branch
    %20 = sbr.rel (0) target = $region5
  $region4: #{net_forward.1} parent=0 // pred_region
    _
  $region5: #{net_forward.1} parent=0 // pred_fallthru
    _
  // Predicated region
  $region6: #{net_forward.1} parent=0 // pred_check
    _
  $region7: #{net_forward.1} parent=0 // pred_check_branch
    %22 = sbr.rel (0) target = $region9
  $region8: #{net_forward.1} parent=0 // pred_region
    _
  $region9: #{net_forward.1} parent=0 // pred_fallthru
    _
  // Predicated region
  $region10: #{net_forward.1} parent=0 // pred_check
    _
  $region11: #{net_forward.1} parent=0 // pred_check_branch
    %24 = sbr.rel (0) target = $region13
  $region12: #{net_forward.1} parent=0 // pred_region
    _
  $region13: #{net_forward.1} parent=0 // pred_fallthru
    _
  // Predicated region
  $region14: #{net_forward.1} parent=0 // pred_check
    _
  $region15: #{net_forward.1} parent=0 // pred_check_branch
    %26 = sbr.rel (0) target = $region17
  $region16: #{net_forward.1} parent=0 // pred_region
    _
  $region17: #{net_forward.1} parent=0 // pred_fallthru
    _
  // Predicated region
  $region18: #{net_forward.1} parent=0 // pred_check
    _
  $region19: #{net_forward.1} parent=0 // pred_check_branch
    %28 = sbr.rel (0) target = $region21
  $region20: #{net_forward.1} parent=0 // pred_region
    _
  $region21: #{net_forward.1} parent=0 // pred_fallthru
    _
  // Predicated region
  $region22: #{net_forward.1} parent=0 // pred_check
    _
  $region23: #{net_forward.1} parent=0 // pred_check_branch
    %30 = sbr.rel (0) target = $region25
  $region24: #{net_forward.1} parent=0 // pred_region
    _
  $region25: #{net_forward.1} parent=0 // pred_fallthru
    _
  // Predicated region
  $region26: #{net_forward.1} parent=0 // pred_check
    _
  $region27: #{net_forward.1} parent=0 // pred_check_branch
    %32 = sbr.rel (0) target = $region29
  $region28: #{net_forward.1} parent=0 // pred_region
    _
  $region29: #{net_forward.1} parent=0 // pred_fallthru
    _
  // Predicated region
  $region30: #{net_forward.1} parent=0 // pred_check
    _
  $region31: #{net_forward.1} parent=0 // pred_check_branch
    %34 = sbr.rel (0) target = $region33
  $region32: #{net_forward.1} parent=0 // pred_region
    _
  $region33: #{net_forward.1} parent=0 // pred_fallthru
    _
  // Predicated region
  $region34: #{net_forward.1} parent=0 // pred_check
    _
  $region35: #{net_forward.1} parent=0 // pred_check_branch
    %36 = sbr.rel (0) target = $region37
  $region36: #{net_forward.1} parent=0 // pred_region
    _
  $region37: #{net_forward.1} parent=0 // pred_fallthru
    _
  // Predicated region
  $region38: #{net_forward.1} parent=0 // pred_check
    _
  $region39: #{net_forward.1} parent=0 // pred_check_branch
    %38 = sbr.rel (0) target = $region41
  $region40: #{net_forward.1} parent=0 // pred_region
    _
  $region41: #{net_forward.1} parent=0 // pred_fallthru
    _
  // Predicated region
  $region42: #{net_forward.1} parent=0 // pred_check
    _
  $region43: #{net_forward.1} parent=0 // pred_check_branch
    %40 = sbr.rel (0) target = $region45
  $region44: #{net_forward.1} parent=0 // pred_region
    _
  $region45: #{net_forward.1} parent=0 // pred_fallthru
    _
  // Predicated region
  $region46: #{net_forward.1} parent=0 // pred_check
    _
  $region47: #{net_forward.1} parent=0 // pred_check_branch
    %42 = sbr.rel (0) target = $region49
  $region48: #{net_forward.1} parent=0 // pred_region
    _
  $region49: #{net_forward.1} parent=0 // pred_fallthru
    _
  // Predicated region
  $region50: #{net_forward.1} parent=0 // pred_check
    _
  $region51: #{net_forward.1} parent=0 // pred_check_branch
    %44 = sbr.rel (0) target = $region53
  $region52: #{net_forward.1} parent=0 // pred_region
    _
  $region53: #{net_forward.1} parent=0 // pred_fallthru
    _
  // Predicated region
  $region54: #{net_forward.1} parent=0 // pred_check
    _
  $region55: #{net_forward.1} parent=0 // pred_check_branch
    %46 = sbr.rel (0) target = $region57
  $region56: #{net_forward.1} parent=0 // pred_region
    _
  $region57: #{net_forward.1} parent=0 // pred_fallthru
    _
  %v47 = vld [vmem:[%s0] sm:$0x1]
  %v48 = vld [vmem:[%s0 + $0x1] sm:$0x1]
  %vm49 = vcmp.gt.s32.totalorder %v47, 1
  %v50 = vsel %vm49, %v47, 1
  %vm51 = vcmp.gt.s32.totalorder %v48, 1
  %v52 = vsel %vm51, %v48, 1
  %vm53 = vcmp.lt.s32.totalorder %v50, 8
  %v54 = vsel %vm53, %v50, 8
  %vm55 = vcmp.lt.s32.totalorder %v52, 8
  %v56 = vsel %vm55, %v52, 8
  %v57 = vlaneseq
  %v58 = vshrl.u32 %v57, 7
  %v59 = vlaneseq
  %v60 = vshrl.u32 %v59, 7
  %v61 = vsub.s32 0, %v60
  %v62 = vrot.slane %v54, %v61
  %v63 = vlaneseq
  %v64 = vshrl.u32 %v63, 7
  %v65 = vsub.s32 0, %v64
  %v66 = vrot.slane %v56, %v65
  %67 = vset.pattern.permute.xlu0 0
  %68 = vperm.xlu0 %67, %v62
  %v69 = vpop.permute.xlu0 %68
  %70 = vset.pattern.permute.xlu0 0
  %71 = vperm.xlu0 %70, %v66
  %v72 = vpop.permute.xlu0 %71
  %vm73 = vcmp.lt.s32.totalorder %v58, %v69
  %vm74 = vcmp.lt.s32.totalorder %v58, %v72
  %v75 = vld [vmem:[%s1] sm:$0xff]
  %v76 = vld [vmem:[%s1 + $0x8] sm:$0xff]
  %v77 = vld [vmem:[%s1 + $0x10] sm:$0xff]
  %v78 = vld [vmem:[%s1 + $0x18] sm:$0xff]
  %v79 = vld [vmem:[%s1 + $0x20] sm:$0xff]
  %v80 = vld [vmem:[%s1 + $0x28] sm:$0xff]
  %v81 = vld [vmem:[%s1 + $0x30] sm:$0xff]
  %v82 = vld [vmem:[%s1 + $0x38] sm:$0xff]
  %v83 = vld [vmem:[%s1 + $0x40] sm:$0xff]
  %v84 = vld [vmem:[%s1 + $0x48] sm:$0xff]
  %v85 = vld [vmem:[%s1 + $0x50] sm:$0xff]
  %v86 = vld [vmem:[%s1 + $0x58] sm:$0xff]
  %v87 = vld [vmem:[%s1 + $0x60] sm:$0xff]
  %v88 = vld [vmem:[%s1 + $0x68] sm:$0xff]
  %v89 = vld [vmem:[%s1 + $0x70] sm:$0xff]
  %v90 = vld [vmem:[%s1 + $0x78] sm:$0xff]
  %v91 = vsel %vm73, %v75, 0.0
  %v92 = vsel %vm73, %v76, 0.0
  %v93 = vsel %vm73, %v77, 0.0
  %v94 = vsel %vm73, %v78, 0.0
  %v95 = vsel %vm73, %v79, 0.0
  %v96 = vsel %vm73, %v80, 0.0
  %v97 = vsel %vm73, %v81, 0.0
  %v98 = vsel %vm73, %v82, 0.0
  %v99 = vsel %vm74, %v83, 0.0
  %v100 = vsel %vm74, %v84, 0.0
  %v101 = vsel %vm74, %v85, 0.0
  %v102 = vsel %vm74, %v86, 0.0
  %v103 = vsel %vm74, %v87, 0.0
  %v104 = vsel %vm74, %v88, 0.0
  %v105 = vsel %vm74, %v89, 0.0
  %v106 = vsel %vm74, %v90, 0.0
  %v107 = vrot.slane %v91, 4
  %v108 = vadd.f32 %v91, %v107
  %v109 = vrot.slane %v108, 2
  %v110 = vadd.f32 %v108, %v109
  %v111 = vrot.slane %v110, 1
  %v112 = vadd.f32 %v110, %v111
  %v113 = vrot.slane %v92, 4
  %v114 = vadd.f32 %v92, %v113
  %v115 = vrot.slane %v114, 2
  %v116 = vadd.f32 %v114, %v115
  %v117 = vrot.slane %v116, 1
  %v118 = vadd.f32 %v116, %v117
  %v119 = vrot.slane %v93, 4
  %v120 = vadd.f32 %v93, %v119
  %v121 = vrot.slane %v120, 2
  %v122 = vadd.f32 %v120, %v121
  %v123 = vrot.slane %v122, 1
  %v124 = vadd.f32 %v122, %v123
  %v125 = vrot.slane %v94, 4
  %v126 = vadd.f32 %v94, %v125
  %v127 = vrot.slane %v126, 2
  %v128 = vadd.f32 %v126, %v127
  %v129 = vrot.slane %v128, 1
  %v130 = vadd.f32 %v128, %v129
  %v131 = vrot.slane %v95, 4
  %v132 = vadd.f32 %v95, %v131
  %v133 = vrot.slane %v132, 2
  %v134 = vadd.f32 %v132, %v133
  %v135 = vrot.slane %v134, 1
  %v136 = vadd.f32 %v134, %v135
  %v137 = vrot.slane %v96, 4
  %v138 = vadd.f32 %v96, %v137
  %v139 = vrot.slane %v138, 2
  %v140 = vadd.f32 %v138, %v139
  %v141 = vrot.slane %v140, 1
  %v142 = vadd.f32 %v140, %v141
  %v143 = vrot.slane %v97, 4
  %v144 = vadd.f32 %v97, %v143
  %v145 = vrot.slane %v144, 2
  %v146 = vadd.f32 %v144, %v145
  %v147 = vrot.slane %v146, 1
  %v148 = vadd.f32 %v146, %v147
  %v149 = vrot.slane %v98, 4
  %v150 = vadd.f32 %v98, %v149
  %v151 = vrot.slane %v150, 2
  %v152 = vadd.f32 %v150, %v151
  %v153 = vrot.slane %v152, 1
  %v154 = vadd.f32 %v152, %v153
  %v155 = vrot.slane %v99, 4
  %v156 = vadd.f32 %v99, %v155
  %v157 = vrot.slane %v156, 2
  %v158 = vadd.f32 %v156, %v157
  %v159 = vrot.slane %v158, 1
  %v160 = vadd.f32 %v158, %v159
  %v161 = vrot.slane %v100, 4
  %v162 = vadd.f32 %v100, %v161
  %v163 = vrot.slane %v162, 2
  %v164 = vadd.f32 %v162, %v163
  %v165 = vrot.slane %v164, 1
  %v166 = vadd.f32 %v164, %v165
  %v167 = vrot.slane %v101, 4
  %v168 = vadd.f32 %v101, %v167
  %v169 = vrot.slane %v168, 2
  %v170 = vadd.f32 %v168, %v169
  %v171 = vrot.slane %v170, 1
  %v172 = vadd.f32 %v170, %v171
  %v173 = vrot.slane %v102, 4
  %v174 = vadd.f32 %v102, %v173
  %v175 = vrot.slane %v174, 2
  %v176 = vadd.f32 %v174, %v175
  %v177 = vrot.slane %v176, 1
  %v178 = vadd.f32 %v176, %v177
  %v179 = vrot.slane %v103, 4
  %v180 = vadd.f32 %v103, %v179
  %v181 = vrot.slane %v180, 2
  %v182 = vadd.f32 %v180, %v181
  %v183 = vrot.slane %v182, 1
  %v184 = vadd.f32 %v182, %v183
  %v185 = vrot.slane %v104, 4
  %v186 = vadd.f32 %v104, %v185
  %v187 = vrot.slane %v186, 2
  %v188 = vadd.f32 %v186, %v187
  %v189 = vrot.slane %v188, 1
  %v190 = vadd.f32 %v188, %v189
  %v191 = vrot.slane %v105, 4
  %v192 = vadd.f32 %v105, %v191
  %v193 = vrot.slane %v192, 2
  %v194 = vadd.f32 %v192, %v193
  %v195 = vrot.slane %v194, 1
  %v196 = vadd.f32 %v194, %v195
  %v197 = vrot.slane %v106, 4
  %v198 = vadd.f32 %v106, %v197
  %v199 = vrot.slane %v198, 2
  %v200 = vadd.f32 %v198, %v199
  %v201 = vrot.slane %v200, 1
  %v202 = vadd.f32 %v200, %v201
  %v203 = vcvt.s32.f32 %v54
  %v204 = vcvt.s32.f32 %v56
  %v205 = vrcp.pop %v203
  %v206 = vmul.f32 1.0, %v205
  %v207 = vrcp.pop %v204
  %v208 = vmul.f32 1.0, %v207
  %v209 = vld [vmem:[%s2] sm:$0x3]
  %v210 = vld [vmem:[%s4] sm:$0xff]
  %v211 = vld [vmem:[%s4 + $0x8] sm:$0xff]
  %v212 = vld [vmem:[%s4 + $0x10] sm:$0xff]
  %v213 = vld [vmem:[%s4 + $0x18] sm:$0xff]
  %v214 = vld [vmem:[%s4 + $0x20] sm:$0xff]
  %v215 = vld [vmem:[%s4 + $0x28] sm:$0xff]
  %v216 = vld [vmem:[%s5] sm:$0x1]
  %v218 = vlaneseq
  %v219 = vshrl.u32 %v218, 7
  %v220 = vsub.s32 0, %v219
  %v221 = vrot.slane %v216, %v220
  %vm223 = vcmask 392192
  %v225 = vsel %vm223, %v209, 0
  %227 = vmatprep.subr.mxu0 0.0
  %228 = vmatpush1.msra.mxu0 %v210
  %229 = vmatprep.subr.mxu0 0.0
  %230 = vmatpush1.msra.mxu0 %v211
  %231 = vmatprep.subr.mxu0 0.0
  %232 = vmatpush1.msra.mxu0 %v212
  %233 = vmatprep.subr.mxu0 0.0
  %234 = vmatpush1.msra.mxu0 %v213
  %235 = vmatprep.subr.mxu0 0.0
  %236 = vmatpush1.msra.mxu0 %v214
  %237 = vmatprep.subr.mxu0 0.0
  %238 = vmatpush1.msra.mxu0 %v215
  %239 = vmatprep.subr.mxu0 0.0
  %240 = vmatpush1.msra.mxu0 0.0
  %241 = vmatprep.subr.mxu0 0.0
  %242 = vmatpush1.msra.mxu0 0.0
  %243 = vmatprep.subr.mxu0 0.0
  %244 = vmatpush1.msra.mxu0 0.0
  %245 = vmatprep.subr.mxu0 0.0
  %246 = vmatpush1.msra.mxu0 0.0
  %247 = vmatprep.subr.mxu0 0.0
  %248 = vmatpush1.msra.mxu0 0.0
  %249 = vmatprep.subr.mxu0 0.0
  %250 = vmatpush1.msra.mxu0 0.0
  %251 = vmatprep.subr.mxu0 0.0
  %252 = vmatpush1.msra.mxu0 0.0
  %253 = vmatprep.subr.mxu0 0.0
  %254 = vmatpush1.msra.mxu0 0.0
  %255 = vmatprep.subr.mxu0 0.0
  %256 = vmatpush1.msra.mxu0 0.0
  %257 = vmatprep.subr.mxu0 0.0
  %258 = vmatpush1.msra.mxu0 0.0
  %259 = vmatprep.subr.mxu0 0.0
  %260 = vmatpush1.msra.mxu0 0.0
  %261 = vmatprep.subr.mxu0 0.0
  %262 = vmatpush1.msra.mxu0 0.0
  %263 = vmatprep.subr.mxu0 0.0
  %264 = vmatpush1.msra.mxu0 0.0
  %265 = vmatprep.subr.mxu0 0.0
  %266 = vmatpush1.msra.mxu0 0.0
  %267 = vmatprep.subr.mxu0 0.0
  %268 = vmatpush1.msra.mxu0 0.0
  %269 = vmatprep.subr.mxu0 0.0
  %270 = vmatpush1.msra.mxu0 0.0
  %271 = vmatprep.subr.mxu0 0.0
  %272 = vmatpush1.msra.mxu0 0.0
  %273 = vmatprep.subr.mxu0 0.0
  %274 = vmatpush1.msra.mxu0 0.0
  %275 = vmatprep.subr.mxu0 0.0
  %276 = vmatpush1.msra.mxu0 0.0
  %277 = vmatprep.subr.mxu0 0.0
  %278 = vmatpush1.msra.mxu0 0.0
  %279 = vmatprep.subr.mxu0 0.0
  %280 = vmatpush1.msra.mxu0 0.0
  %281 = vmatprep.subr.mxu0 0.0
  %282 = vmatpush1.msra.mxu0 0.0
  %283 = vmatprep.subr.mxu0 0.0
  %284 = vmatpush1.msra.mxu0 0.0
  %285 = vmatprep.subr.mxu0 0.0
  %286 = vmatpush1.msra.mxu0 0.0
  %287 = vmatprep.subr.mxu0 0.0
  %288 = vmatpush1.msra.mxu0 0.0
  %289 = vmatprep.subr.mxu0 0.0
  %290 = vmatpush1.msra.mxu0 0.0
  %291 = vmatprep.mubr.f32.mxu0 0.0
  %292 = vmatmul.mubr.f32.gmra.mrb[0].mxu0 %v225
  %v293 = vpop.f32.mrb[0].mxu0
  %v294 = vadd.f32 %v221, %v293
  %v295 = vpop.f32.mrb[0].mxu0
  %296 = vdwg.mxu0
  %v297 = vld [vmem:[%s6] sm:$0xff]
  %v298 = vld [vmem:[%s6 + $0x8] sm:$0xff]
  %v299 = vld [vmem:[%s6 + $0x10] sm:$0xff]
  %v300 = vld [vmem:[%s6 + $0x18] sm:$0xff]
  %v301 = vld [vmem:[%s6 + $0x20] sm:$0xff]
  %v302 = vld [vmem:[%s6 + $0x28] sm:$0xff]
  %v303 = vld [vmem:[%s6 + $0x30] sm:$0xff]
  %v304 = vld [vmem:[%s6 + $0x38] sm:$0xff]
  %v305 = vld [vmem:[%s6 + $0x40] sm:$0xff]
  %v306 = vld [vmem:[%s6 + $0x48] sm:$0xff]
  %v307 = vld [vmem:[%s6 + $0x50] sm:$0xff]
  %v308 = vld [vmem:[%s6 + $0x58] sm:$0xff]
  %v309 = vld [vmem:[%s6 + $0x60] sm:$0xff]
  %v310 = vld [vmem:[%s6 + $0x68] sm:$0xff]
  %v311 = vld [vmem:[%s6 + $0x70] sm:$0xff]
  %v312 = vld [vmem:[%s6 + $0x78] sm:$0xff]
  %v313 = vld [vmem:[%s6 + $0x80] sm:$0xff]
  %v314 = vld [vmem:[%s6 + $0x88] sm:$0xff]
  %v315 = vld [vmem:[%s6 + $0x90] sm:$0xff]
  %v316 = vld [vmem:[%s6 + $0x98] sm:$0xff]
  %v317 = vld [vmem:[%s6 + $0xa0] sm:$0xff]
  %v318 = vld [vmem:[%s6 + $0xa8] sm:$0xff]
  %v319 = vld [vmem:[%s6 + $0xb0] sm:$0xff]
  %v320 = vld [vmem:[%s6 + $0xb8] sm:$0xff]
  %v321 = vld [vmem:[%s6 + $0xc0] sm:$0xff]
  %v322 = vld [vmem:[%s6 + $0xc8] sm:$0xff]
  %v323 = vld [vmem:[%s6 + $0xd0] sm:$0xff]
  %v324 = vld [vmem:[%s6 + $0xd8] sm:$0xff]
  %v325 = vld [vmem:[%s6 + $0xe0] sm:$0xff]
  %v326 = vld [vmem:[%s6 + $0xe8] sm:$0xff]
  %v327 = vld [vmem:[%s6 + $0xf0] sm:$0xff]
  %v328 = vld [vmem:[%s6 + $0xf8] sm:$0xff]
  %v329 = vld [vmem:[%s6 + $0x100] sm:$0xff]
  %v330 = vld [vmem:[%s6 + $0x108] sm:$0xff]
  %v331 = vld [vmem:[%s6 + $0x110] sm:$0xff]
  %v332 = vld [vmem:[%s6 + $0x118] sm:$0xff]
  %v333 = vld [vmem:[%s6 + $0x120] sm:$0xff]
  %v334 = vld [vmem:[%s6 + $0x128] sm:$0xff]
  %v335 = vld [vmem:[%s6 + $0x130] sm:$0xff]
  %v336 = vld [vmem:[%s6 + $0x138] sm:$0xff]
  %v337 = vld [vmem:[%s6 + $0x140] sm:$0xff]
  %v338 = vld [vmem:[%s6 + $0x148] sm:$0xff]
  %v339 = vld [vmem:[%s6 + $0x150] sm:$0xff]
  %v340 = vld [vmem:[%s6 + $0x158] sm:$0xff]
  %v341 = vld [vmem:[%s6 + $0x160] sm:$0xff]
  %v342 = vld [vmem:[%s6 + $0x168] sm:$0xff]
  %v343 = vld [vmem:[%s6 + $0x170] sm:$0xff]
  %v344 = vld [vmem:[%s6 + $0x178] sm:$0xff]
  %v345 = vld [vmem:[%s6 + $0x180] sm:$0xff]
  %v346 = vld [vmem:[%s6 + $0x188] sm:$0xff]
  %v347 = vld [vmem:[%s6 + $0x190] sm:$0xff]
  %v348 = vld [vmem:[%s6 + $0x198] sm:$0xff]
  %v349 = vld [vmem:[%s6 + $0x1a0] sm:$0xff]
  %v350 = vld [vmem:[%s6 + $0x1a8] sm:$0xff]
  %v351 = vld [vmem:[%s6 + $0x1b0] sm:$0xff]
  %v352 = vld [vmem:[%s6 + $0x1b8] sm:$0xff]
  %v353 = vld [vmem:[%s6 + $0x1c0] sm:$0xff]
  %v354 = vld [vmem:[%s6 + $0x1c8] sm:$0xff]
  %v355 = vld [vmem:[%s6 + $0x1d0] sm:$0xff]
  %v356 = vld [vmem:[%s6 + $0x1d8] sm:$0xff]
  %v357 = vld [vmem:[%s6 + $0x1e0] sm:$0xff]
  %v358 = vld [vmem:[%s6 + $0x1e8] sm:$0xff]
  %v359 = vld [vmem:[%s6 + $0x1f0] sm:$0xff]
  %v360 = vld [vmem:[%s6 + $0x1f8] sm:$0xff]
  %v361 = vld [vmem:[%s6 + $0x200] sm:$0xff]
  %v362 = vld [vmem:[%s6 + $0x208] sm:$0xff]
  %v363 = vld [vmem:[%s6 + $0x210] sm:$0xff]
  %v364 = vld [vmem:[%s6 + $0x218] sm:$0xff]
  %v365 = vld [vmem:[%s6 + $0x220] sm:$0xff]
  %v366 = vld [vmem:[%s6 + $0x228] sm:$0xff]
  %v367 = vld [vmem:[%s6 + $0x230] sm:$0xff]
  %v368 = vld [vmem:[%s6 + $0x238] sm:$0xff]
  %v369 = vld [vmem:[%s6 + $0x240] sm:$0xff]
  %v370 = vld [vmem:[%s6 + $0x248] sm:$0xff]
  %v371 = vld [vmem:[%s6 + $0x250] sm:$0xff]
  %v372 = vld [vmem:[%s6 + $0x258] sm:$0xff]
  %v373 = vld [vmem:[%s6 + $0x260] sm:$0xff]
  %v374 = vld [vmem:[%s6 + $0x268] sm:$0xff]
  %v375 = vld [vmem:[%s6 + $0x270] sm:$0xff]
  %v376 = vld [vmem:[%s6 + $0x278] sm:$0xff]
  %v377 = vld [vmem:[%s6 + $0x280] sm:$0xff]
  %v378 = vld [vmem:[%s6 + $0x288] sm:$0xff]
  %v379 = vld [vmem:[%s6 + $0x290] sm:$0xff]
  %v380 = vld [vmem:[%s6 + $0x298] sm:$0xff]
  %v381 = vld [vmem:[%s6 + $0x2a0] sm:$0xff]
  %v382 = vld [vmem:[%s6 + $0x2a8] sm:$0xff]
  %v383 = vld [vmem:[%s6 + $0x2b0] sm:$0xff]
  %v384 = vld [vmem:[%s6 + $0x2b8] sm:$0xff]
  %v385 = vld [vmem:[%s6 + $0x2c0] sm:$0xff]
  %v386 = vld [vmem:[%s6 + $0x2c8] sm:$0xff]
  %v387 = vld [vmem:[%s6 + $0x2d0] sm:$0xff]
  %v388 = vld [vmem:[%s6 + $0x2d8] sm:$0xff]
  %v389 = vld [vmem:[%s6 + $0x2e0] sm:$0xff]
  %v390 = vld [vmem:[%s6 + $0x2e8] sm:$0xff]
  %v391 = vld [vmem:[%s6 + $0x2f0] sm:$0xff]
  %v392 = vld [vmem:[%s6 + $0x2f8] sm:$0xff]
  %v393 = vld [vmem:[%s6 + $0x300] sm:$0xff]
  %v394 = vld [vmem:[%s6 + $0x308] sm:$0xff]
  %v395 = vld [vmem:[%s6 + $0x310] sm:$0xff]
  %v396 = vld [vmem:[%s6 + $0x318] sm:$0xff]
  %v397 = vld [vmem:[%s6 + $0x320] sm:$0xff]
  %v398 = vld [vmem:[%s6 + $0x328] sm:$0xff]
  %v399 = vld [vmem:[%s6 + $0x330] sm:$0xff]
  %v400 = vld [vmem:[%s6 + $0x338] sm:$0xff]
  %v401 = vld [vmem:[%s6 + $0x340] sm:$0xff]
  %v402 = vld [vmem:[%s6 + $0x348] sm:$0xff]
  %v403 = vld [vmem:[%s6 + $0x350] sm:$0xff]
  %v404 = vld [vmem:[%s6 + $0x358] sm:$0xff]
  %v405 = vld [vmem:[%s6 + $0x360] sm:$0xff]
  %v406 = vld [vmem:[%s6 + $0x368] sm:$0xff]
  %v407 = vld [vmem:[%s6 + $0x370] sm:$0xff]
  %v408 = vld [vmem:[%s6 + $0x378] sm:$0xff]
  %v409 = vld [vmem:[%s6 + $0x380] sm:$0xff]
  %v410 = vld [vmem:[%s6 + $0x388] sm:$0xff]
  %v411 = vld [vmem:[%s6 + $0x390] sm:$0xff]
  %v412 = vld [vmem:[%s6 + $0x398] sm:$0xff]
  %v413 = vld [vmem:[%s6 + $0x3a0] sm:$0xff]
  %v414 = vld [vmem:[%s6 + $0x3a8] sm:$0xff]
  %v415 = vld [vmem:[%s6 + $0x3b0] sm:$0xff]
  %v416 = vld [vmem:[%s6 + $0x3b8] sm:$0xff]
  %v417 = vld [vmem:[%s6 + $0x3c0] sm:$0xff]
  %v418 = vld [vmem:[%s6 + $0x3c8] sm:$0xff]
  %v419 = vld [vmem:[%s6 + $0x3d0] sm:$0xff]
  %v420 = vld [vmem:[%s6 + $0x3d8] sm:$0xff]
  %v421 = vld [vmem:[%s6 + $0x3e0] sm:$0xff]
  %v422 = vld [vmem:[%s6 + $0x3e8] sm:$0xff]
  %v423 = vld [vmem:[%s6 + $0x3f0] sm:$0xff]
  %v424 = vld [vmem:[%s6 + $0x3f8] sm:$0xff]
  %vm441 = vcmask 1041409
  %v442 = vsel %vm441, %v160, %v112
  %v443 = vsel %vm441, %v166, %v118
  %v444 = vsel %vm441, %v172, %v124
  %v445 = vsel %vm441, %v178, %v130
  %v446 = vsel %vm441, %v184, %v136
  %v447 = vsel %vm441, %v190, %v142
  %v448 = vsel %vm441, %v196, %v148
  %v449 = vsel %vm441, %v202, %v154
  %458 = vmatprep.subr.mxu0 0.0
  %459 = vmatpush1.msra.mxu0 %v297
  %460 = vmatprep.subr.mxu0 0.0
  %461 = vmatpush1.msra.mxu0 %v298
  %462 = vmatprep.subr.mxu0 0.0
  %463 = vmatpush1.msra.mxu0 %v299
  %464 = vmatprep.subr.mxu0 0.0
  %465 = vmatpush1.msra.mxu0 %v300
  %466 = vmatprep.subr.mxu0 0.0
  %467 = vmatpush1.msra.mxu0 %v301
  %468 = vmatprep.subr.mxu0 0.0
  %469 = vmatpush1.msra.mxu0 %v302
  %470 = vmatprep.subr.mxu0 0.0
  %471 = vmatpush1.msra.mxu0 %v303
  %472 = vmatprep.subr.mxu0 0.0
  %473 = vmatpush1.msra.mxu0 %v304
  %474 = vmatprep.subr.mxu0 0.0
  %475 = vmatpush1.msra.mxu0 %v305
  %476 = vmatprep.subr.mxu0 0.0
  %477 = vmatpush1.msra.mxu0 %v306
  %478 = vmatprep.subr.mxu0 0.0
  %479 = vmatpush1.msra.mxu0 %v307
  %480 = vmatprep.subr.mxu0 0.0
  %481 = vmatpush1.msra.mxu0 %v308
  %482 = vmatprep.subr.mxu0 0.0
  %483 = vmatpush1.msra.mxu0 %v309
  %484 = vmatprep.subr.mxu0 0.0
  %485 = vmatpush1.msra.mxu0 %v310
  %486 = vmatprep.subr.mxu0 0.0
  %487 = vmatpush1.msra.mxu0 %v311
  %488 = vmatprep.subr.mxu0 0.0
  %489 = vmatpush1.msra.mxu0 %v312
  %490 = vmatprep.subr.mxu0 0.0
  %491 = vmatpush1.msra.mxu0 %v313
  %492 = vmatprep.subr.mxu0 0.0
  %493 = vmatpush1.msra.mxu0 %v314
  %494 = vmatprep.subr.mxu0 0.0
  %495 = vmatpush1.msra.mxu0 %v315
  %496 = vmatprep.subr.mxu0 0.0
  %497 = vmatpush1.msra.mxu0 %v316
  %498 = vmatprep.subr.mxu0 0.0
  %499 = vmatpush1.msra.mxu0 %v317
  %500 = vmatprep.subr.mxu0 0.0
  %501 = vmatpush1.msra.mxu0 %v318
  %502 = vmatprep.subr.mxu0 0.0
  %503 = vmatpush1.msra.mxu0 %v319
  %504 = vmatprep.subr.mxu0 0.0
  %505 = vmatpush1.msra.mxu0 %v320
  %506 = vmatprep.subr.mxu0 0.0
  %507 = vmatpush1.msra.mxu0 %v321
  %508 = vmatprep.subr.mxu0 0.0
  %509 = vmatpush1.msra.mxu0 %v322
  %510 = vmatprep.subr.mxu0 0.0
  %511 = vmatpush1.msra.mxu0 %v323
  %512 = vmatprep.subr.mxu0 0.0
  %513 = vmatpush1.msra.mxu0 %v324
  %514 = vmatprep.subr.mxu0 0.0
  %515 = vmatpush1.msra.mxu0 %v325
  %516 = vmatprep.subr.mxu0 0.0
  %517 = vmatpush1.msra.mxu0 %v326
  %518 = vmatprep.subr.mxu0 0.0
  %519 = vmatpush1.msra.mxu0 %v327
  %520 = vmatprep.subr.mxu0 0.0
  %521 = vmatpush1.msra.mxu0 %v328
  %522 = vmatprep.mubr.f32.mxu0 %v443
  %523 = vmatmul.mubr.f32.gmra.mrb[0].mxu0 %v442
  %v524 = vpop.f32.mrb[0].mxu0
  %v525 = vadd.f32 0.0, %v524
  %v526 = vpop.f32.mrb[0].mxu0
  %527 = vdwg.mxu0
  %528 = vmatprep.subr.mxu0 0.0
  %529 = vmatpush1.msra.mxu0 %v329
  %530 = vmatprep.subr.mxu0 0.0
  %531 = vmatpush1.msra.mxu0 %v330
  %532 = vmatprep.subr.mxu0 0.0
  %533 = vmatpush1.msra.mxu0 %v331
  %534 = vmatprep.subr.mxu0 0.0
  %535 = vmatpush1.msra.mxu0 %v332
  %536 = vmatprep.subr.mxu0 0.0
  %537 = vmatpush1.msra.mxu0 %v333
  %538 = vmatprep.subr.mxu0 0.0
  %539 = vmatpush1.msra.mxu0 %v334
  %540 = vmatprep.subr.mxu0 0.0
  %541 = vmatpush1.msra.mxu0 %v335
  %542 = vmatprep.subr.mxu0 0.0
  %543 = vmatpush1.msra.mxu0 %v336
  %544 = vmatprep.subr.mxu0 0.0
  %545 = vmatpush1.msra.mxu0 %v337
  %546 = vmatprep.subr.mxu0 0.0
  %547 = vmatpush1.msra.mxu0 %v338
  %548 = vmatprep.subr.mxu0 0.0
  %549 = vmatpush1.msra.mxu0 %v339
  %550 = vmatprep.subr.mxu0 0.0
  %551 = vmatpush1.msra.mxu0 %v340
  %552 = vmatprep.subr.mxu0 0.0
  %553 = vmatpush1.msra.mxu0 %v341
  %554 = vmatprep.subr.mxu0 0.0
  %555 = vmatpush1.msra.mxu0 %v342
  %556 = vmatprep.subr.mxu0 0.0
  %557 = vmatpush1.msra.mxu0 %v343
  %558 = vmatprep.subr.mxu0 0.0
  %559 = vmatpush1.msra.mxu0 %v344
  %560 = vmatprep.subr.mxu0 0.0
  %561 = vmatpush1.msra.mxu0 %v345
  %562 = vmatprep.subr.mxu0 0.0
  %563 = vmatpush1.msra.mxu0 %v346
  %564 = vmatprep.subr.mxu0 0.0
  %565 = vmatpush1.msra.mxu0 %v347
  %566 = vmatprep.subr.mxu0 0.0
  %567 = vmatpush1.msra.mxu0 %v348
  %568 = vmatprep.subr.mxu0 0.0
  %569 = vmatpush1.msra.mxu0 %v349
  %570 = vmatprep.subr.mxu0 0.0
  %571 = vmatpush1.msra.mxu0 %v350
  %572 = vmatprep.subr.mxu0 0.0
  %573 = vmatpush1.msra.mxu0 %v351
  %574 = vmatprep.subr.mxu0 0.0
  %575 = vmatpush1.msra.mxu0 %v352
  %576 = vmatprep.subr.mxu0 0.0
  %577 = vmatpush1.msra.mxu0 %v353
  %578 = vmatprep.subr.mxu0 0.0
  %579 = vmatpush1.msra.mxu0 %v354
  %580 = vmatprep.subr.mxu0 0.0
  %581 = vmatpush1.msra.mxu0 %v355
  %582 = vmatprep.subr.mxu0 0.0
  %583 = vmatpush1.msra.mxu0 %v356
  %584 = vmatprep.subr.mxu0 0.0
  %585 = vmatpush1.msra.mxu0 %v357
  %586 = vmatprep.subr.mxu0 0.0
  %587 = vmatpush1.msra.mxu0 %v358
  %588 = vmatprep.subr.mxu0 0.0
  %589 = vmatpush1.msra.mxu0 %v359
  %590 = vmatprep.subr.mxu0 0.0
  %591 = vmatpush1.msra.mxu0 %v360
  %592 = vmatprep.mubr.f32.mxu0 %v445
  %593 = vmatmul.mubr.f32.gmra.mrb[0].mxu0 %v444
  %v594 = vpop.f32.mrb[0].mxu0
  %v595 = vadd.f32 %v525, %v594
  %v596 = vpop.f32.mrb[0].mxu0
  %597 = vdwg.mxu0
  %598 = vmatprep.subr.mxu0 0.0
  %599 = vmatpush1.msra.mxu0 %v361
  %600 = vmatprep.subr.mxu0 0.0
  %601 = vmatpush1.msra.mxu0 %v362
  %602 = vmatprep.subr.mxu0 0.0
  %603 = vmatpush1.msra.mxu0 %v363
  %604 = vmatprep.subr.mxu0 0.0
  %605 = vmatpush1.msra.mxu0 %v364
  %606 = vmatprep.subr.mxu0 0.0
  %607 = vmatpush1.msra.mxu0 %v365
  %608 = vmatprep.subr.mxu0 0.0
  %609 = vmatpush1.msra.mxu0 %v366
  %610 = vmatprep.subr.mxu0 0.0
  %611 = vmatpush1.msra.mxu0 %v367
  %612 = vmatprep.subr.mxu0 0.0
  %613 = vmatpush1.msra.mxu0 %v368
  %614 = vmatprep.subr.mxu0 0.0
  %615 = vmatpush1.msra.mxu0 %v369
  %616 = vmatprep.subr.mxu0 0.0
  %617 = vmatpush1.msra.mxu0 %v370
  %618 = vmatprep.subr.mxu0 0.0
  %619 = vmatpush1.msra.mxu0 %v371
  %620 = vmatprep.subr.mxu0 0.0
  %621 = vmatpush1.msra.mxu0 %v372
  %622 = vmatprep.subr.mxu0 0.0
  %623 = vmatpush1.msra.mxu0 %v373
  %624 = vmatprep.subr.mxu0 0.0
  %625 = vmatpush1.msra.mxu0 %v374
  %626 = vmatprep.subr.mxu0 0.0
  %627 = vmatpush1.msra.mxu0 %v375
  %628 = vmatprep.subr.mxu0 0.0
  %629 = vmatpush1.msra.mxu0 %v376
  %630 = vmatprep.subr.mxu0 0.0
  %631 = vmatpush1.msra.mxu0 %v377
  %632 = vmatprep.subr.mxu0 0.0
  %633 = vmatpush1.msra.mxu0 %v378
  %634 = vmatprep.subr.mxu0 0.0
  %635 = vmatpush1.msra.mxu0 %v379
  %636 = vmatprep.subr.mxu0 0.0
  %637 = vmatpush1.msra.mxu0 %v380
  %638 = vmatprep.subr.mxu0 0.0
  %639 = vmatpush1.msra.mxu0 %v381
  %640 = vmatprep.subr.mxu0 0.0
  %641 = vmatpush1.msra.mxu0 %v382
  %642 = vmatprep.subr.mxu0 0.0
  %643 = vmatpush1.msra.mxu0 %v383
  %644 = vmatprep.subr.mxu0 0.0
  %645 = vmatpush1.msra.mxu0 %v384
  %646 = vmatprep.subr.mxu0 0.0
  %647 = vmatpush1.msra.mxu0 %v385
  %648 = vmatprep.subr.mxu0 0.0
  %649 = vmatpush1.msra.mxu0 %v386
  %650 = vmatprep.subr.mxu0 0.0
  %651 = vmatpush1.msra.mxu0 %v387
  %652 = vmatprep.subr.mxu0 0.0
  %653 = vmatpush1.msra.mxu0 %v388
  %654 = vmatprep.subr.mxu0 0.0
  %655 = vmatpush1.msra.mxu0 %v389
  %656 = vmatprep.subr.mxu0 0.0
  %657 = vmatpush1.msra.mxu0 %v390
  %658 = vmatprep.subr.mxu0 0.0
  %659 = vmatpush1.msra.mxu0 %v391
  %660 = vmatprep.subr.mxu0 0.0
  %661 = vmatpush1.msra.mxu0 %v392
  %662 = vmatprep.mubr.f32.mxu0 %v447
  %663 = vmatmul.mubr.f32.gmra.mrb[0].mxu0 %v446
  %v664 = vpop.f32.mrb[0].mxu0
  %v665 = vadd.f32 %v595, %v664
  %v666 = vpop.f32.mrb[0].mxu0
  %667 = vdwg.mxu0
  %668 = vmatprep.subr.mxu0 0.0
  %669 = vmatpush1.msra.mxu0 %v393
  %670 = vmatprep.subr.mxu0 0.0
  %671 = vmatpush1.msra.mxu0 %v394
  %672 = vmatprep.subr.mxu0 0.0
  %673 = vmatpush1.msra.mxu0 %v395
  %674 = vmatprep.subr.mxu0 0.0
  %675 = vmatpush1.msra.mxu0 %v396
  %676 = vmatprep.subr.mxu0 0.0
  %677 = vmatpush1.msra.mxu0 %v397
  %678 = vmatprep.subr.mxu0 0.0
  %679 = vmatpush1.msra.mxu0 %v398
  %680 = vmatprep.subr.mxu0 0.0
  %681 = vmatpush1.msra.mxu0 %v399
  %682 = vmatprep.subr.mxu0 0.0
  %683 = vmatpush1.msra.mxu0 %v400
  %684 = vmatprep.subr.mxu0 0.0
  %685 = vmatpush1.msra.mxu0 %v401
  %686 = vmatprep.subr.mxu0 0.0
  %687 = vmatpush1.msra.mxu0 %v402
  %688 = vmatprep.subr.mxu0 0.0
  %689 = vmatpush1.msra.mxu0 %v403
  %690 = vmatprep.subr.mxu0 0.0
  %691 = vmatpush1.msra.mxu0 %v404
  %692 = vmatprep.subr.mxu0 0.0
  %693 = vmatpush1.msra.mxu0 %v405
  %694 = vmatprep.subr.mxu0 0.0
  %695 = vmatpush1.msra.mxu0 %v406
  %696 = vmatprep.subr.mxu0 0.0
  %697 = vmatpush1.msra.mxu0 %v407
  %698 = vmatprep.subr.mxu0 0.0
  %699 = vmatpush1.msra.mxu0 %v408
  %700 = vmatprep.subr.mxu0 0.0
  %701 = vmatpush1.msra.mxu0 %v409
  %702 = vmatprep.subr.mxu0 0.0
  %703 = vmatpush1.msra.mxu0 %v410
  %704 = vmatprep.subr.mxu0 0.0
  %705 = vmatpush1.msra.mxu0 %v411
  %706 = vmatprep.subr.mxu0 0.0
  %707 = vmatpush1.msra.mxu0 %v412
  %708 = vmatprep.subr.mxu0 0.0
  %709 = vmatpush1.msra.mxu0 %v413
  %710 = vmatprep.subr.mxu0 0.0
  %711 = vmatpush1.msra.mxu0 %v414
  %712 = vmatprep.subr.mxu0 0.0
  %713 = vmatpush1.msra.mxu0 %v415
  %714 = vmatprep.subr.mxu0 0.0
  %715 = vmatpush1.msra.mxu0 %v416
  %716 = vmatprep.subr.mxu0 0.0
  %717 = vmatpush1.msra.mxu0 %v417
  %718 = vmatprep.subr.mxu0 0.0
  %719 = vmatpush1.msra.mxu0 %v418
  %720 = vmatprep.subr.mxu0 0.0
  %721 = vmatpush1.msra.mxu0 %v419
  %722 = vmatprep.subr.mxu0 0.0
  %723 = vmatpush1.msra.mxu0 %v420
  %724 = vmatprep.subr.mxu0 0.0
  %725 = vmatpush1.msra.mxu0 %v421
  %726 = vmatprep.subr.mxu0 0.0
  %727 = vmatpush1.msra.mxu0 %v422
  %728 = vmatprep.subr.mxu0 0.0
  %729 = vmatpush1.msra.mxu0 %v423
  %730 = vmatprep.subr.mxu0 0.0
  %731 = vmatpush1.msra.mxu0 %v424
  %732 = vmatprep.mubr.f32.mxu0 %v449
  %733 = vmatmul.mubr.f32.gmra.mrb[0].mxu0 %v448
  %v734 = vpop.f32.mrb[0].mxu0
  %v735 = vadd.f32 %v665, %v734
  %v736 = vpop.f32.mrb[0].mxu0
  %737 = vdwg.mxu0
  %739 = vset.pattern.permute.xlu0 0
  %740 = vperm.xlu0 %739, %v206
  %v741 = vpop.permute.xlu0 %740
  %v743 = vlaneseq
  %v744 = vshrl.u32 %v743, 7
  %v745 = vsub.s32 0, %v744
  %v746 = vrot.slane %v741, %v745
  %748 = vset.pattern.permute.xlu0 0
  %749 = vperm.xlu0 %748, %v208
  %v750 = vpop.permute.xlu0 %749
  %v752 = vlaneseq
  %v753 = vshrl.u32 %v752, 7
  %v754 = vsub.s32 0, %v753
  %v755 = vrot.slane %v750, %v754
  %v758 = vcombine.low %v746, %v755
  %v760 = vunpack.c.l.s4 1966171168
  %v761 = vunpack.c.0.s8 %v760
  %v762 = vlaneseq
  %v763 = vshrl.u32 %v762, 7
  %v764 = vsub.s32 %v761, %v763
  %v765 = vrot.slane %v758, %v764
  %v767 = vunpack.c.l.s4 1966171168
  %v768 = vunpack.c.0.s8 %v767
  %v769 = vlaneseq
  %v770 = vshrl.u32 %v769, 7
  %v771 = vsub.s32 %v768, %v770
  %v772 = vrot.slane %v765, %v771
  %v774 = vmul.f32 %v735, %v772
  %v775 = vld [vmem:[%s7] sm:$0x1]
  %v777 = vlaneseq
  %v778 = vshrl.u32 %v777, 7
  %v779 = vsub.s32 0, %v778
  %v780 = vrot.slane %v775, %v779
  %v782 = vadd.f32 %v774, %v780
  %v783 = vld [vmem:[%s3] sm:$0xff]
  %v784 = vld [vmem:[%s3 + $0x8] sm:$0xff]
  %v785 = vld [vmem:[%s8] sm:$0xff]
  %v786 = vld [vmem:[%s8 + $0x8] sm:$0xff]
  %v787 = vld [vmem:[%s8 + $0x10] sm:$0xff]
  %v788 = vld [vmem:[%s9] sm:$0x1]
  %v790 = vlaneseq
  %v791 = vshrl.u32 %v790, 7
  %v792 = vsub.s32 0, %v791
  %v793 = vrot.slane %v788, %v792
  %vm795 = vcmask 195584
  %v797 = vsel %vm795, %v783, 0
  %v800 = vsel %vm795, %v784, 0
  %802 = vmatprep.subr.mxu0 0.0
  %803 = vmatpush1.msra.mxu0 %v785
  %804 = vmatprep.subr.mxu0 0.0
  %805 = vmatpush1.msra.mxu0 %v786
  %806 = vmatprep.subr.mxu0 0.0
  %807 = vmatpush1.msra.mxu0 %v787
  %808 = vmatprep.subr.mxu0 0.0
  %809 = vmatpush1.msra.mxu0 0.0
  %810 = vmatprep.subr.mxu0 0.0
  %811 = vmatpush1.msra.mxu0 0.0
  %812 = vmatprep.subr.mxu0 0.0
  %813 = vmatpush1.msra.mxu0 0.0
  %814 = vmatprep.subr.mxu0 0.0
  %815 = vmatpush1.msra.mxu0 0.0
  %816 = vmatprep.subr.mxu0 0.0
  %817 = vmatpush1.msra.mxu0 0.0
  %818 = vmatprep.subr.mxu0 0.0
  %819 = vmatpush1.msra.mxu0 0.0
  %820 = vmatprep.subr.mxu0 0.0
  %821 = vmatpush1.msra.mxu0 0.0
  %822 = vmatprep.subr.mxu0 0.0
  %823 = vmatpush1.msra.mxu0 0.0
  %824 = vmatprep.subr.mxu0 0.0
  %825 = vmatpush1.msra.mxu0 0.0
  %826 = vmatprep.subr.mxu0 0.0
  %827 = vmatpush1.msra.mxu0 0.0
  %828 = vmatprep.subr.mxu0 0.0
  %829 = vmatpush1.msra.mxu0 0.0
  %830 = vmatprep.subr.mxu0 0.0
  %831 = vmatpush1.msra.mxu0 0.0
  %832 = vmatprep.subr.mxu0 0.0
  %833 = vmatpush1.msra.mxu0 0.0
  %834 = vmatprep.subr.mxu0 0.0
  %835 = vmatpush1.msra.mxu0 0.0
  %836 = vmatprep.subr.mxu0 0.0
  %837 = vmatpush1.msra.mxu0 0.0
  %838 = vmatprep.subr.mxu0 0.0
  %839 = vmatpush1.msra.mxu0 0.0
  %840 = vmatprep.subr.mxu0 0.0
  %841 = vmatpush1.msra.mxu0 0.0
  %842 = vmatprep.subr.mxu0 0.0
  %843 = vmatpush1.msra.mxu0 0.0
  %844 = vmatprep.subr.mxu0 0.0
  %845 = vmatpush1.msra.mxu0 0.0
  %846 = vmatprep.subr.mxu0 0.0
  %847 = vmatpush1.msra.mxu0 0.0
  %848 = vmatprep.subr.mxu0 0.0
  %849 = vmatpush1.msra.mxu0 0.0
  %850 = vmatprep.subr.mxu0 0.0
  %851 = vmatpush1.msra.mxu0 0.0
  %852 = vmatprep.subr.mxu0 0.0
  %853 = vmatpush1.msra.mxu0 0.0
  %854 = vmatprep.subr.mxu0 0.0
  %855 = vmatpush1.msra.mxu0 0.0
  %856 = vmatprep.subr.mxu0 0.0
  %857 = vmatpush1.msra.mxu0 0.0
  %858 = vmatprep.subr.mxu0 0.0
  %859 = vmatpush1.msra.mxu0 0.0
  %860 = vmatprep.subr.mxu0 0.0
  %861 = vmatpush1.msra.mxu0 0.0
  %862 = vmatprep.subr.mxu0 0.0
  %863 = vmatpush1.msra.mxu0 0.0
  %864 = vmatprep.subr.mxu0 0.0
  %865 = vmatpush1.msra.mxu0 0.0
  %866 = vmatprep.mubr.f32.mxu0 0.0
  %867 = vmatmul.mubr.f32.gmra.mrb[0].mxu0 %v797
  %v868 = vpop.f32.mrb[0].mxu0
  %v869 = vadd.f32 %v793, %v868
  %v870 = vpop.f32.mrb[0].mxu0
  %871 = vmatprep.mubr.f32.mxu0 0.0
  %872 = vmatmul.mubr.f32.gmra.mrb[0].mxu0 %v800
  %v873 = vpop.f32.mrb[0].mxu0
  %v874 = vadd.f32 %v793, %v873
  %v875 = vpop.f32.mrb[0].mxu0
  %876 = vdwg.mxu0
  %vm877 = vcmask 130048
  %v878 = vsel %vm877, %v869, -inf
  %v879 = vrot.slane %v878, 4
  %v880 = vmax.f32 %v878, %v879
  %v881 = vrot.slane %v880, 2
  %v882 = vmax.f32 %v880, %v881
  %v883 = vrot.slane %v882, 1
  %v884 = vmax.f32 %v882, %v883
  %v885 = vsel %vm877, %v874, -inf
  %v886 = vrot.slane %v885, 4
  %v887 = vmax.f32 %v885, %v886
  %v888 = vrot.slane %v887, 2
  %v889 = vmax.f32 %v887, %v888
  %v890 = vrot.slane %v889, 1
  %v891 = vmax.f32 %v889, %v890
  %v892 = vmax.f32 %v884, 0.0
  %v893 = vmax.f32 %v891, 0.0
  %v896 = vsel %vm441, %v893, %v892
  %897 = vrot.lane.b32.xlu0 %v896, 16
  %v898 = vpop.permute.xlu0 %897
  %v900 = vsel %vm877, %v782, %v898
  %902 = vrot.lane.b32.xlu0 %v294, 16
  %v903 = vpop.permute.xlu0 %902
  %v905 = vsel %vm877, %v782, %v903
  %v907 = vsel %vm877, %v896, %v903
  %v909 = vrot.slane %v905, 6
  %v912 = vrot.slane %v907, 4
  %vm914 = vcmask 1041408
  %v915 = vsel %vm914, %v900, %v909
  %vm916 = vcmask 1043456
  %v917 = vsel %vm916, %v915, %v912
  %v918 = vld [vmem:[%s10] sm:$0xff]
  %v919 = vld [vmem:[%s10 + $0x8] sm:$0xff]
  %v920 = vld [vmem:[%s10 + $0x10] sm:$0xff]
  %v921 = vld [vmem:[%s10 + $0x18] sm:$0xff]
  %v922 = vld [vmem:[%s11] sm:$0x1]
  %v924 = vlaneseq
  %v925 = vshrl.u32 %v924, 7
  %v926 = vsub.s32 0, %v925
  %v927 = vrot.slane %v922, %v926
  %vm929 = vcmask 261120
  %v931 = vsel %vm929, %v917, 0
  %933 = vmatprep.subr.mxu0 0.0
  %934 = vmatpush1.msra.mxu0 %v918
  %935 = vmatprep.subr.mxu0 0.0
  %936 = vmatpush1.msra.mxu0 %v919
  %937 = vmatprep.subr.mxu0 0.0
  %938 = vmatpush1.msra.mxu0 %v920
  %939 = vmatprep.subr.mxu0 0.0
  %940 = vmatpush1.msra.mxu0 %v921
  %941 = vmatprep.subr.mxu0 0.0
  %942 = vmatpush1.msra.mxu0 0.0
  %943 = vmatprep.subr.mxu0 0.0
  %944 = vmatpush1.msra.mxu0 0.0
  %945 = vmatprep.subr.mxu0 0.0
  %946 = vmatpush1.msra.mxu0 0.0
  %947 = vmatprep.subr.mxu0 0.0
  %948 = vmatpush1.msra.mxu0 0.0
  %949 = vmatprep.subr.mxu0 0.0
  %950 = vmatpush1.msra.mxu0 0.0
  %951 = vmatprep.subr.mxu0 0.0
  %952 = vmatpush1.msra.mxu0 0.0
  %953 = vmatprep.subr.mxu0 0.0
  %954 = vmatpush1.msra.mxu0 0.0
  %955 = vmatprep.subr.mxu0 0.0
  %956 = vmatpush1.msra.mxu0 0.0
  %957 = vmatprep.subr.mxu0 0.0
  %958 = vmatpush1.msra.mxu0 0.0
  %959 = vmatprep.subr.mxu0 0.0
  %960 = vmatpush1.msra.mxu0 0.0
  %961 = vmatprep.subr.mxu0 0.0
  %962 = vmatpush1.msra.mxu0 0.0
  %963 = vmatprep.subr.mxu0 0.0
  %964 = vmatpush1.msra.mxu0 0.0
  %965 = vmatprep.subr.mxu0 0.0
  %966 = vmatpush1.msra.mxu0 0.0
  %967 = vmatprep.subr.mxu0 0.0
  %968 = vmatpush1.msra.mxu0 0.0
  %969 = vmatprep.subr.mxu0 0.0
  %970 = vmatpush1.msra.mxu0 0.0
  %971 = vmatprep.subr.mxu0 0.0
  %972 = vmatpush1.msra.mxu0 0.0
  %973 = vmatprep.subr.mxu0 0.0
  %974 = vmatpush1.msra.mxu0 0.0
  %975 = vmatprep.subr.mxu0 0.0
  %976 = vmatpush1.msra.mxu0 0.0
  %977 = vmatprep.subr.mxu0 0.0
  %978 = vmatpush1.msra.mxu0 0.0
  %979 = vmatprep.subr.mxu0 0.0
  %980 = vmatpush1.msra.mxu0 0.0
  %981 = vmatprep.subr.mxu0 0.0
  %982 = vmatpush1.msra.mxu0 0.0
  %983 = vmatprep.subr.mxu0 0.0
  %984 = vmatpush1.msra.mxu0 0.0
  %985 = vmatprep.subr.mxu0 0.0
  %986 = vmatpush1.msra.mxu0 0.0
  %987 = vmatprep.subr.mxu0 0.0
  %988 = vmatpush1.msra.mxu0 0.0
  %989 = vmatprep.subr.mxu0 0.0
  %990 = vmatpush1.msra.mxu0 0.0
  %991 = vmatprep.subr.mxu0 0.0
  %992 = vmatpush1.msra.mxu0 0.0
  %993 = vmatprep.subr.mxu0 0.0
  %994 = vmatpush1.msra.mxu0 0.0
  %995 = vmatprep.subr.mxu0 0.0
  %996 = vmatpush1.msra.mxu0 0.0
  %997 = vmatprep.mubr.f32.mxu0 0.0
  %998 = vmatmul.mubr.f32.gmra.mrb[0].mxu0 %v931
  %v999 = vpop.f32.mrb[0].mxu0
  %v1000 = vadd.f32 %v927, %v999
  %v1001 = vpop.f32.mrb[0].mxu0
  %1002 = vdwg.mxu0
  %v1003 = vld [vmem:[%s12] sm:$0xff]
  %v1004 = vld [vmem:[%s12 + $0x8] sm:$0xff]
  %v1005 = vld [vmem:[%s12 + $0x10] sm:$0xff]
  %v1006 = vld [vmem:[%s12 + $0x18] sm:$0xff]
  %v1007 = vld [vmem:[%s13] sm:$0x1]
  %v1009 = vlaneseq
  %v1010 = vshrl.u32 %v1009, 7
  %v1011 = vsub.s32 0, %v1010
  %v1012 = vrot.slane %v1007, %v1011
  %v1015 = vsel %vm929, %v1000, 0
  %1017 = vmatprep.subr.mxu0 0.0
  %1018 = vmatpush1.msra.mxu0 %v1003
  %1019 = vmatprep.subr.mxu0 0.0
  %1020 = vmatpush1.msra.mxu0 %v1004
  %1021 = vmatprep.subr.mxu0 0.0
  %1022 = vmatpush1.msra.mxu0 %v1005
  %1023 = vmatprep.subr.mxu0 0.0
  %1024 = vmatpush1.msra.mxu0 %v1006
  %1025 = vmatprep.subr.mxu0 0.0
  %1026 = vmatpush1.msra.mxu0 0.0
  %1027 = vmatprep.subr.mxu0 0.0
  %1028 = vmatpush1.msra.mxu0 0.0
  %1029 = vmatprep.subr.mxu0 0.0
  %1030 = vmatpush1.msra.mxu0 0.0
  %1031 = vmatprep.subr.mxu0 0.0
  %1032 = vmatpush1.msra.mxu0 0.0
  %1033 = vmatprep.subr.mxu0 0.0
  %1034 = vmatpush1.msra.mxu0 0.0
  %1035 = vmatprep.subr.mxu0 0.0
  %1036 = vmatpush1.msra.mxu0 0.0
  %1037 = vmatprep.subr.mxu0 0.0
  %1038 = vmatpush1.msra.mxu0 0.0
  %1039 = vmatprep.subr.mxu0 0.0
  %1040 = vmatpush1.msra.mxu0 0.0
  %1041 = vmatprep.subr.mxu0 0.0
  %1042 = vmatpush1.msra.mxu0 0.0
  %1043 = vmatprep.subr.mxu0 0.0
  %1044 = vmatpush1.msra.mxu0 0.0
  %1045 = vmatprep.subr.mxu0 0.0
  %1046 = vmatpush1.msra.mxu0 0.0
  %1047 = vmatprep.subr.mxu0 0.0
  %1048 = vmatpush1.msra.mxu0 0.0
  %1049 = vmatprep.subr.mxu0 0.0
  %1050 = vmatpush1.msra.mxu0 0.0
  %1051 = vmatprep.subr.mxu0 0.0
  %1052 = vmatpush1.msra.mxu0 0.0
  %1053 = vmatprep.subr.mxu0 0.0
  %1054 = vmatpush1.msra.mxu0 0.0
  %1055 = vmatprep.subr.mxu0 0.0
  %1056 = vmatpush1.msra.mxu0 0.0
  %1057 = vmatprep.subr.mxu0 0.0
  %1058 = vmatpush1.msra.mxu0 0.0
  %1059 = vmatprep.subr.mxu0 0.0
  %1060 = vmatpush1.msra.mxu0 0.0
  %1061 = vmatprep.subr.mxu0 0.0
  %1062 = vmatpush1.msra.mxu0 0.0
  %1063 = vmatprep.subr.mxu0 0.0
  %1064 = vmatpush1.msra.mxu0 0.0
  %1065 = vmatprep.subr.mxu0 0.0
  %1066 = vmatpush1.msra.mxu0 0.0
  %1067 = vmatprep.subr.mxu0 0.0
  %1068 = vmatpush1.msra.mxu0 0.0
  %1069 = vmatprep.subr.mxu0 0.0
  %1070 = vmatpush1.msra.mxu0 0.0
  %1071 = vmatprep.subr.mxu0 0.0
  %1072 = vmatpush1.msra.mxu0 0.0
  %1073 = vmatprep.subr.mxu0 0.0
  %1074 = vmatpush1.msra.mxu0 0.0
  %1075 = vmatprep.subr.mxu0 0.0
  %1076 = vmatpush1.msra.mxu0 0.0
  %1077 = vmatprep.subr.mxu0 0.0
  %1078 = vmatpush1.msra.mxu0 0.0
  %1079 = vmatprep.subr.mxu0 0.0
  %1080 = vmatpush1.msra.mxu0 0.0
  %1081 = vmatprep.mubr.f32.mxu0 0.0
  %1082 = vmatmul.mubr.f32.gmra.mrb[0].mxu0 %v1015
  %v1083 = vpop.f32.mrb[0].mxu0
  %v1084 = vadd.f32 %v1012, %v1083
  %v1085 = vpop.f32.mrb[0].mxu0
  %1086 = vdwg.mxu0
  %v1087 = vxor.u32 %v1084, 2147483648
  %v1088 = vmul.f32 %v1087, 1.442695
  %v1089 = vpow.pop %v1088
  %v1090 = vadd.f32 %v1089, 1.0
  %v1091 = vrcp.pop %v1090
  %v1092 = vmul.f32 1.0, %v1091
  %v1093 = vmul.f32 %v1000, %v1092
  %vm1094 = vcmask 254976
  %1095 = vst.msk [vmem:[%s14] sm:$0x3] %vm1094, %v1093
  %s1096 = scalar_lea.vmem %s14, 2
  %vm1097 = vcmask 257026
  %1098 = vst.msk [vmem:[%s1096 - $0x2] sm:$0xc] %vm1097, %v1093
  %s1099 = scalar_lea.vmem %s14, 4
  %vm1100 = vcmask 259076
  %1101 = vst.msk [vmem:[%s1099 - $0x4] sm:$0x30] %vm1100, %v1093
  // Predicated region
  $region58: #{net_forward.1} parent=0 // pred_check
    _
  $region59: #{net_forward.1} parent=0 // pred_check_branch
    %1103 = sbr.rel (0) target = $region61
  $region60: #{net_forward.1} parent=0 // pred_region
    _
  $region61: #{net_forward.1} parent=0 // pred_fallthru
    _
  // Predicated region
  $region62: #{net_forward.1} parent=0 // pred_check
    _
  $region63: #{net_forward.1} parent=0 // pred_check_branch
    %1105 = sbr.rel (0) target = $region65
  $region64: #{net_forward.1} parent=0 // pred_region
    _
  $region65: #{net_forward.1} parent=0 // pred_fallthru
    _

</llo_original>
